<compile_context>
chip_gen: v5e
topology: v5e:2x2
jax: 0.10.0
libtpu: 0.0.40
codegen_flags: <defaults>
</compile_context>

<pallas_src>
import jax
import jax.numpy as jnp
from jax.experimental import pallas as pl
from jax.experimental.pallas import tpu as pltpu

_LANE = 128  # vreg lane width


def _planar_flow_jacobian_kernel(scal_ref, zt_ref, w_ref, out_ref):
    # scal_ref : SMEM f32[2]           = [bias, w·u]   (scalar path, ~free)
    # zt_ref   : VMEM f32[D, BLOCK_N]   transposed batch tile (lane-dense)
    # w_ref    : VMEM f32[D, 1]         weight column (constant across grid)
    # out_ref  : VMEM f32[1, BLOCK_N]   log|Jacobian| slab (lane-dense store)
    b = scal_ref[0]
    wu = scal_ref[1]

    zt = zt_ref[...]                                  # [D, BN]
    w = w_ref[...]                                    # [D, 1], lane-broadcast

    # F.linear(z, w, b) for every column: reduce over the sublane axis (D=32).
    lin = jnp.sum(zt * w, axis=0, keepdims=True) + b  # [1, BN] lane-dense
    t = jnp.tanh(lin)                                 # EUP, lane-dense

    # Jacobian = 1 + psi_z @ u.T = 1 + (1 - tanh^2) * (w·u), with w·u hoisted.
    jac = 1.0 + (1.0 - t * t) * wu                    # [1, BN]
    out_ref[...] = jnp.log(jnp.abs(jac) + 1e-8)       # unmasked full-lane vst


def _round_up(x, m):
    return ((x + m - 1) // m) * m


def planar_flow_jacobian(z, weight, bias, u, *, tile_n=8192):
    """z: [N, D]; weight, u: [1, D]; bias: [1] -> log|Jacobian|: [N, 1]."""
    N, D = z.shape

    # Layout plumbing: one XLA transpose so the kernel sees a lane-dense
    # [D, N] slab (callers that can produce z pre-transposed avoid this copy).
    zt = jnp.transpose(z.astype(jnp.float32))                 # [D, N]
    w_col = jnp.reshape(weight, (D, 1)).astype(jnp.float32)   # [D, 1]
    u_row = jnp.reshape(u, (1, D)).astype(jnp.float32)
    b = jnp.reshape(bias, (-1,)).astype(jnp.float32)[0]

    # Hoist the w·u reduction entirely out of the kernel; pack [bias, w·u]
    # into one SMEM array.
    wu = jnp.sum(w_col[:, 0] * u_row[0, :])
    scalars = jnp.stack([b, wu])                               # f32[2] -> SMEM

    # Block selection (no padding of z; last block may be partial):
    #  * N < 256        : single block covering the whole batch.
    #  * 256 <= N <= tile: two 128-aligned blocks so v7x's 2nd TC gets work.
    #  * N > tile       : tile_n-wide blocks, grid = cdiv(N, tile_n).
    if N < 2 * _LANE:
        block_n = N
    elif N <= tile_n:
        block_n = _round_up(pl.cdiv(N, 2), _LANE)
    else:
        block_n = tile_n
    grid = (pl.cdiv(N, block_n),)

    cost = pl.CostEstimate(
        flops=2 * N * D + 8 * N,
        transcendentals=2 * N,
        bytes_accessed=N * D * 4 + N * 4 + D * 4 + 8,
    )

    out = pl.pallas_call(
        _planar_flow_jacobian_kernel,
        out_shape=jax.ShapeDtypeStruct((1, N), jnp.float32),
        grid=grid,
        in_specs=[
            pl.BlockSpec(memory_space=pltpu.MemorySpace.SMEM),   # [bias, w·u]
            pl.BlockSpec((D, block_n), lambda i: (0, i)),        # z.T tile
            pl.BlockSpec((D, 1), lambda i: (0, 0)),              # weight col
        ],
        out_specs=pl.BlockSpec((1, block_n), lambda i: (0, i)),
        compiler_params=pltpu.CompilerParams(
            dimension_semantics=("parallel",)),
        cost_estimate=cost,
    )(scalars, zt, w_col)

    # (1, N) -> (N, 1) is a free row-major reshape.
    return jnp.reshape(out, (N, 1))


def _reference(z, weight, bias, u):
    """Pure-JAX replica of the PyTorch forward for verification."""
    tmp = z @ weight.T + bias                        # F.linear -> [N, 1]
    psi = (1.0 - jnp.tanh(tmp) ** 2) * weight        # [N, D]
    jac = 1.0 + psi @ u.T                            # [N, 1]
    return jnp.log(jnp.abs(jac) + 1e-8)


if __name__ == "__main__":
    # Module config consistent with a planar flow of dimension 32.
    N, D = 8, 32

    key = jax.random.PRNGKey(0)
    k_z, k_w, k_b, k_u = jax.random.split(key, 4)

    # uniform_(-0.01, 0.01) init, mirroring the planar-flow transform params.
    weight = jax.random.uniform(k_w, (1, D), jnp.float32, -0.01, 0.01)
    bias = jax.random.uniform(k_b, (1,), jnp.float32, -0.01, 0.01)
    u = jax.random.uniform(k_u, (1, D), jnp.float32, -0.01, 0.01)
    z = jax.random.normal(k_z, (N, D), jnp.float32)

    out = jax.block_until_ready(planar_flow_jacobian(z, weight, bias, u))
    ref = _reference(z, weight, bias, u)
    assert out.shape == (N, 1)
    assert jnp.allclose(out, ref, atol=1e-5, rtol=1e-5)

    # Two-block grid path (exercises the "parallel" axis / megacore split).
    N2 = 4096
    z2 = jax.random.normal(jax.random.PRNGKey(1), (N2, D), jnp.float32)
    out2 = jax.block_until_ready(planar_flow_jacobian(z2, weight, bias, u))
    ref2 = _reference(z2, weight, bias, u)
    assert out2.shape == (N2, 1)
    assert jnp.allclose(out2, ref2, atol=1e-5, rtol=1e-5)

    # Ragged batch (N not a multiple of 128): exercises the partial final
    # block with masked tail stores and no jnp.pad of z.
    N3 = 1000
    z3 = jax.random.normal(jax.random.PRNGKey(2), (N3, D), jnp.float32)
    out3 = jax.block_until_ready(planar_flow_jacobian(z3, weight, bias, u))
    ref3 = _reference(z3, weight, bias, u)
    assert out3.shape == (N3, 1)
    assert jnp.allclose(out3, ref3, atol=1e-5, rtol=1e-5)

    print("KERNEL_OK")
</pallas_src>

<mosaic_0001>
module attributes {stable_mosaic.version = 11 : i64} {
  func.func @_planar_flow_jacobian_kernel(%arg0: i32, %arg1: memref<2xf32, #tpu.memory_space<smem>>, %arg2: memref<32x8xf32, #tpu.memory_space<vmem>>, %arg3: memref<32x1xf32, #tpu.memory_space<vmem>>, %arg4: memref<1x8xf32, #tpu.memory_space<vmem>>) attributes {dimension_semantics = [#tpu.dimension_semantics<parallel>], iteration_bounds = array<i64: 1>, scalar_prefetch = 0 : i64, scratch_operands = 0 : i64, tpu.core_type = #tpu.core_type<tc>, window_params = [{transform_indices = @transform_0, window_bounds = array<i64: 2>}, {transform_indices = @transform_1, window_bounds = array<i64: 32, 8>}, {pipeline_mode = #tpu.pipeline_mode<synchronous>, transform_indices = @transform_2, window_bounds = array<i64: 32, 1>}, {transform_indices = @transform_3, window_bounds = array<i64: 1, 8>}]} {
    %c0 = arith.constant 0 : index
    %0 = memref.load %arg1[%c0] : memref<2xf32, #tpu.memory_space<smem>>
    %c1 = arith.constant 1 : index
    %1 = memref.load %arg1[%c1] : memref<2xf32, #tpu.memory_space<smem>>
    %c0_0 = arith.constant 0 : index
    %c0_1 = arith.constant 0 : index
    %2 = vector.load %arg2[%c0_0, %c0_1] : memref<32x8xf32, #tpu.memory_space<vmem>>, vector<32x8xf32>
    %c0_2 = arith.constant 0 : index
    %c0_3 = arith.constant 0 : index
    %3 = vector.load %arg3[%c0_2, %c0_3] : memref<32x1xf32, #tpu.memory_space<vmem>>, vector<32x1xf32>
    %4 = vector.broadcast %3 : vector<32x1xf32> to vector<32x8xf32>
    %5 = arith.mulf %2, %4 : vector<32x8xf32>
    %cst = arith.constant dense<0.000000e+00> : vector<8xf32>
    %6 = vector.multi_reduction <add>, %5, %cst [0] : vector<32x8xf32> to vector<8xf32>
    %7 = vector.shape_cast %6 : vector<8xf32> to vector<1x8xf32>
    %8 = vector.broadcast %0 : f32 to vector<1x8xf32>
    %9 = arith.addf %7, %8 : vector<1x8xf32>
    %10 = math.tanh %9 : vector<1x8xf32>
    %11 = arith.mulf %10, %10 : vector<1x8xf32>
    %cst_4 = arith.constant 1.000000e+00 : f32
    %12 = vector.broadcast %cst_4 : f32 to vector<1x8xf32>
    %13 = arith.subf %12, %11 : vector<1x8xf32>
    %14 = vector.broadcast %1 : f32 to vector<1x8xf32>
    %15 = arith.mulf %13, %14 : vector<1x8xf32>
    %cst_5 = arith.constant 1.000000e+00 : f32
    %16 = vector.broadcast %cst_5 : f32 to vector<1x8xf32>
    %17 = arith.addf %16, %15 : vector<1x8xf32>
    %18 = math.absf %17 : vector<1x8xf32>
    %cst_6 = arith.constant 9.99999993E-9 : f32
    %19 = vector.broadcast %cst_6 : f32 to vector<1x8xf32>
    %20 = arith.addf %18, %19 : vector<1x8xf32>
    %21 = math.log %20 : vector<1x8xf32>
    %c0_7 = arith.constant 0 : index
    %c0_8 = arith.constant 0 : index
    %22 = vector.load %arg4[%c0_7, %c0_8] : memref<1x8xf32, #tpu.memory_space<vmem>>, vector<1x8xf32>
    tpu.vector_store %arg4[%c0_7, %c0_8], %21 {strides = array<i32>} : memref<1x8xf32, #tpu.memory_space<vmem>>, vector<1x8xf32>,
    return
  }
  func.func @transform_0(%arg0: i32) -> i32 {
    %c0_i32 = arith.constant 0 : i32
    %c0_i32_0 = arith.constant 0 : i32
    return %c0_i32 : i32
  }
  func.func @transform_1(%arg0: i32) -> (i32, i32) {
    %c0_i32 = arith.constant 0 : i32
    %c0_i32_0 = arith.constant 0 : i32
    return %c0_i32, %arg0 : i32, i32
  }
  func.func @transform_2(%arg0: i32) -> (i32, i32) {
    %c0_i32 = arith.constant 0 : i32
    %c0_i32_0 = arith.constant 0 : i32
    %c0_i32_1 = arith.constant 0 : i32
    return %c0_i32, %c0_i32_0 : i32, i32
  }
  func.func @transform_3(%arg0: i32) -> (i32, i32) {
    %c0_i32 = arith.constant 0 : i32
    %c0_i32_0 = arith.constant 0 : i32
    return %c0_i32, %arg0 : i32, i32
  }
}

</mosaic_0001>

<llo_original>
// kernel: tpu_custom_call.1
$region0: #{tpu_custom_call.1}
  #allocation0 [shape = 'u32[]', space=smem, size = 0x4, offset = 0x4, fixed_abs, tag = 'smem constant byte address 0x4 - core index']
  #allocation1 [shape = 'u32[72,128]{1,0:T(1,128)}', space=vmem, size = 0x9000, scoped, tag = 'internal scratch']
  %s0 = inlined_call_operand.vmem [shape: f32[2], index: 0, kind: input, shape index: {}]
  %s1 = inlined_call_operand.vmem [shape: f32[32,8], index: 1, kind: input, shape index: {}]
  %s2 = inlined_call_operand.vmem [shape: f32[32,1], index: 2, kind: input, shape index: {}]
  %s3 = inlined_call_operand.hbm [shape: f32[1,8], index: 3, kind: output, shape index: {}]
  %s4 = sld [smem:[#allocation0]]
  $region26: #{tpu_custom_call.1} parent=0
    _
  %s6 = ssub.s32 1, %s4
  %s7 = scalar_select 0, %s6, %s4
  $region1: #{tpu_custom_call.1} parent=0
    #allocation2 [shape = 'u8[512]{0}', space=smem, size = 0x200, scoped, tag = 'input window, operand 0, single buffered']
    #allocation3 [shape = 's32[1]{0}', space=sflag, size = 0x4, scoped, tag = 'scoped memory for tpu_custom_call.1']
    #allocation4 [shape = 's32[1]{0}', space=sflag, size = 0x4, scoped, tag = 'scoped memory for tpu_custom_call.1']
    #allocation5 [shape = 'u8[512]{0}', space=vmem, size = 0x400, scoped, tag = 'output window, operand 0, single buffered']
    %8 = vsyncpa [#allocation4], 0
    %9 = vsyncpa [#allocation3], 0
    // Predicated region
    $region2: #{tpu_custom_call.1} parent=1 // pred_check
      _
    $region3: #{tpu_custom_call.1} parent=1 // pred_check_branch
      %11 = sbr.rel (0) target = $region5
    $region4: #{tpu_custom_call.1} parent=1 // pred_region
      %13 = vsyncadd [#allocation4], 0
      %s15 = sshll.u32 %s0, 4
      %s16 = int_to_ptr.vmem [resolvable:$true] %s15
      %18 = dma.vmem_to_smem %s16, 16, [#allocation2], [#allocation4]
    $region5: #{tpu_custom_call.1} parent=1 // pred_fallthru
      _
    // Predicated region
    $region6: #{tpu_custom_call.1} parent=1 // pred_check
      _
    $region7: #{tpu_custom_call.1} parent=1 // pred_check_branch
      %20 = sbr.rel (0) target = $region9
    $region8: #{tpu_custom_call.1} parent=1 // pred_region
      _
    $region9: #{tpu_custom_call.1} parent=1 // pred_fallthru
      _
    // Predicated region
    $region10: #{tpu_custom_call.1} parent=1 // pred_check
      _
    $region11: #{tpu_custom_call.1} parent=1 // pred_check_branch
      %22 = sbr.rel (0) target = $region13
    $region12: #{tpu_custom_call.1} parent=1 // pred_region
      _
    $region13: #{tpu_custom_call.1} parent=1 // pred_fallthru
      _
    // Predicated region
    $region14: #{tpu_custom_call.1} parent=1 // pred_check
      _
    $region15: #{tpu_custom_call.1} parent=1 // pred_check_branch
      %24 = sbr.rel (0) target = $region17
    $region16: #{tpu_custom_call.1} parent=1 // pred_region
      %26 = dma.done [#allocation4], 16
    $region17: #{tpu_custom_call.1} parent=1 // pred_fallthru
      _
    %27 = sfence
    %s28 = sld [smem:[#allocation2]]
    %s29 = sld [smem:[#allocation2 + $0x1]]
    %v30 = vld [vmem:[%s1] sm:$0xff]
    %v31 = vld [vmem:[%s1 + $0x8] sm:$0xff]
    %v32 = vld [vmem:[%s1 + $0x10] sm:$0xff]
    %v33 = vld [vmem:[%s1 + $0x18] sm:$0xff]
    %v34 = vld [vmem:[%s2] sm:$0xff]
    %v35 = vld [vmem:[%s2 + $0x8] sm:$0xff]
    %v36 = vld [vmem:[%s2 + $0x10] sm:$0xff]
    %v37 = vld [vmem:[%s2 + $0x18] sm:$0xff]
    %39 = vset.pattern.permute.xlu0 0
    %40 = vperm.xlu0 %39, %v34
    %v41 = vpop.permute.xlu0 %40
    %44 = vset.pattern.permute.xlu0 0
    %45 = vperm.xlu0 %44, %v35
    %v46 = vpop.permute.xlu0 %45
    %49 = vset.pattern.permute.xlu0 0
    %50 = vperm.xlu0 %49, %v36
    %v51 = vpop.permute.xlu0 %50
    %54 = vset.pattern.permute.xlu0 0
    %55 = vperm.xlu0 %54, %v37
    %v56 = vpop.permute.xlu0 %55
    %v58 = vmul.f32 %v30, %v41
    %v59 = vmul.f32 %v31, %v46
    %v60 = vmul.f32 %v32, %v51
    %v61 = vmul.f32 %v33, %v56
    %vm62 = vcmask 64512
    %v63 = vsel %vm62, %v58, 0.0
    %v64 = vsel %vm62, %v59, 0.0
    %v65 = vadd.f32 %v63, %v64
    %v66 = vsel %vm62, %v60, 0.0
    %v67 = vadd.f32 %v65, %v66
    %v68 = vsel %vm62, %v61, 0.0
    %v69 = vadd.f32 %v67, %v68
    %v70 = vrot.slane %v69, 4
    %v71 = vadd.f32 %v69, %v70
    %v72 = vrot.slane %v71, 2
    %v73 = vadd.f32 %v71, %v72
    %v74 = vrot.slane %v73, 1
    %v75 = vadd.f32 %v73, %v74
    %v76 = vstv %s28
    %v77 = vadd.f32 %v75, %v76
    %v78 = vtanh.pop %v77
    %v79 = vmul.f32 %v78, %v78
    %v80 = vsub.f32 1.0, %v79
    %v81 = vstv %s29
    %v82 = vmul.f32 %v80, %v81
    %v83 = vadd.f32 %v82, 1.0
    %v84 = vand.u32 2147483647, %v83
    %v85 = vadd.f32 %v84, 1e-08
    %v86 = vlog2.pop %v85
    %v87 = vmul.f32 %v86, 0.6931472
    %vm88 = vcmask 57344
    %89 = vst.msk [vmem:[#allocation5] sm:$0x1] %vm88, %v87
    // Predicated region
    $region18: #{tpu_custom_call.1} parent=1 // pred_check
      _
    $region19: #{tpu_custom_call.1} parent=1 // pred_check_branch
      %91 = sbr.rel (0) target = $region21
    $region20: #{tpu_custom_call.1} parent=1 // pred_region
      %93 = vsyncadd [#allocation3], 0
      %s95 = sshll.u32 [#allocation5], 4
      %s96 = int_to_ptr.vmem [resolvable:$true] %s95
      %s97 = sshll.u32 %s3, 4
      %s98 = int_to_ptr.hbm [resolvable:$true] %s97
      %100 = dma.vmem_to_hbm [thread:$0]  %s96, 16, %s98, [#allocation3]
    $region21: #{tpu_custom_call.1} parent=1 // pred_fallthru
      _
    // Predicated region
    $region22: #{tpu_custom_call.1} parent=1 // pred_check
      _
    $region23: #{tpu_custom_call.1} parent=1 // pred_check_branch
      %102 = sbr.rel (0) target = $region25
    $region24: #{tpu_custom_call.1} parent=1 // pred_region
      %104 = dma.done [#allocation3], 16
    $region25: #{tpu_custom_call.1} parent=1 // pred_fallthru
      _
    %105 = vsyncpa [#allocation3], 1
    %106 = vsyncpa [#allocation4], 1

</llo_original>
